<compile_context>
chip_gen: v7x
topology: tpu7x:2x2x1
jax: 0.10.0
libtpu: 0.0.40
codegen_flags: <defaults>
</compile_context>

<pallas_src>
import jax
import jax.numpy as jnp
from jax import lax
from jax.experimental import pallas as pl
from jax.experimental.pallas import tpu as pltpu


KH = KW = 8
STRIDE = 4
C_IN = 1
C_OUT = 32
K_DIM = KH * KW * C_IN          # 64   im2col patch length (lane axis of inputs)
W_FUSED = 2 * C_OUT             # 64   fused conv channels [conv1 | conv2]
OUT_W = 4 * C_OUT               # 128  packed output lanes [x1 | x2 | x3 | x4]
BN_EPS = 1e-5
MAX_ROW_TILE = 8192             # ~6 MiB double-buffered VMEM (bf16 in / bf16 out)


def _row_tiling(r):
    """(row_tile, padded_rows).  Tile up to MAX_ROW_TILE rows, multiple of 128,
    sized from the real R so small inputs are not padded to a huge tile."""
    n_tiles = max(1, pl.cdiv(r, MAX_ROW_TILE))
    tr = pl.cdiv(r, n_tiles)
    tr = ((tr + 127) // 128) * 128
    return tr, n_tiles * tr


def _im2col(x):
    """(N, 1, H, W) -> (R, 64) im2col patches, rows ordered (n, oh, ow)."""
    n, c, h, w = x.shape
    patches = lax.conv_general_dilated_patches(
        x, filter_shape=(KH, KW), window_strides=(STRIDE, STRIDE),
        padding='VALID',
        dimension_numbers=('NCHW', 'OIHW', 'NHWC'))   # (N, OH, OW, C*KH*KW)
    oh = (h - KH) // STRIDE + 1
    ow = (w - KW) // STRIDE + 1
    return patches.reshape(n * oh * ow, c * KH * KW)


@jax.jit
def agent_forward(x, w1, b1, w2, b2):
    """Mirrors Agent.forward: returns x unchanged (the module discards x1..x4).

    Also returns the packed (R, 128) bf16 slab [x1|x2|x3|x4] computed by the
    Pallas kernel so the internal compute can be verified.
    """
    n, c, h, w = x.shape
    oh = (h - KH) // STRIDE + 1
    ow = (w - KW) // STRIDE + 1
    r = n * oh * ow
    inv_r = 1.0 / float(r)

    # bf16 cast is left adjacent to the im2col producer so XLA fuses it
    # (no extra f32 patch materialization in HBM).
    patches = _im2col(x).astype(jnp.bfloat16)                      # (R, 64) bf16

    tr, r_pad = _row_tiling(r)
    if r_pad != r:
        patches = jnp.pad(patches, ((0, r_pad - r), (0, 0)))
    n_tiles = r_pad // tr

    # Widened fused weight: 128-lane dense matmul result, halves 0:64 and
    # 64:128 are both the bias-free [conv1 | conv2].
    w12 = jnp.concatenate([w1, w2], axis=1)                        # (64, 64)
    wf = jnp.concatenate([w12, w12], axis=1).astype(jnp.bfloat16)  # (64, 128)
    bias = jnp.concatenate(
        [b1, b2, jnp.zeros((W_FUSED,), jnp.float32)], axis=0
    ).astype(jnp.float32)[None, :]                                 # (1, 128)

    def kernel(patches_ref, w_ref, bias_ref, out_ref,
               sum_sc, sq_sc, scale_sc, off_sc):
        phase = pl.program_id(0)   # 0 = stats accumulation, 1 = emit
        tile = pl.program_id(1)

        @pl.when(jnp.logical_and(phase == 0, tile == 0))
        def _init():
            sum_sc[...] = jnp.zeros_like(sum_sc)
            sq_sc[...] = jnp.zeros_like(sq_sc)

        # Bias-free fused conv, 128-lane dense, f32 MXU accumulation.
        conv = jnp.dot(patches_ref[...], w_ref[...],
                       preferred_element_type=jnp.float32)         # (TR, 128)

        @pl.when(phase == 0)
        def _accumulate():
            # Zero-padded rows contribute exactly 0 (bias-free conv of zeros).
            sum_sc[...] += jnp.sum(conv, axis=0, keepdims=True)
            sq_sc[...] += jnp.sum(conv * conv, axis=0, keepdims=True)

        @pl.when(jnp.logical_and(phase == 1, tile == 0))
        def _finalize_stats():
            mean = sum_sc[...] * inv_r
            var = jnp.maximum(sq_sc[...] * inv_r - mean * mean, 0.0)
            rstd = lax.rsqrt(var + BN_EPS)                          # EUP slot
            bn_half = lax.broadcasted_iota(jnp.int32, (1, OUT_W), 1) >= W_FUSED
            scale_sc[...] = jnp.where(bn_half, rstd, 1.0)
            off_sc[...] = jnp.where(bn_half, -mean * rstd, bias_ref[...])

        @pl.when(phase == 1)
        def _emit():
            out_ref[...] = (conv * scale_sc[...]
                            + off_sc[...]).astype(out_ref.dtype)

    packed = pl.pallas_call(
        kernel,
        out_shape=jax.ShapeDtypeStruct((r_pad, OUT_W), jnp.bfloat16),
        grid_spec=pltpu.PrefetchScalarGridSpec(
            num_scalar_prefetch=0,
            grid=(2, n_tiles),
            in_specs=[
                pl.BlockSpec((tr, K_DIM), lambda p, i: (i, 0)),
                pl.BlockSpec((K_DIM, OUT_W), lambda p, i: (0, 0)),
                pl.BlockSpec((1, OUT_W), lambda p, i: (0, 0)),
            ],
            # Parked on block 0 during phase 0 (never written there), so each
            # output block is written back to HBM exactly once, in phase 1.
            out_specs=pl.BlockSpec((tr, OUT_W), lambda p, i: (i * p, 0)),
            scratch_shapes=[pltpu.VMEM((1, OUT_W), jnp.float32)] * 4,
        ),
        compiler_params=pltpu.CompilerParams(
            dimension_semantics=("arbitrary", "arbitrary")),
    )(patches, wf, bias)

    packed = packed[:r]
    # The PyTorch module returns only x; `packed` is exposed for verification.
    return x, packed


def unpack_intermediates(packed, n, oh, ow):
    """Split the packed (R, 128) slab into NCHW x1..x4 (verification only)."""
    def to_nchw(v):
        return jnp.transpose(v.reshape(n, oh, ow, C_OUT), (0, 3, 1, 2))
    return tuple(to_nchw(packed[:, i * C_OUT:(i + 1) * C_OUT]) for i in range(4))


def _init_params(key):
    """Deterministic stand-ins for the conv params (shapes match nn.Conv2d)."""
    k1, k2, k3 = jax.random.split(key, 3)
    # network: layer_init -> orthogonal(std=sqrt(2)) weight, zero bias.
    a = jax.random.normal(k1, (K_DIM, K_DIM), dtype=jnp.float32)
    q, _ = jnp.linalg.qr(a)
    w1 = (jnp.sqrt(2.0) * q[:, :C_OUT]).astype(jnp.float32)        # (64, 32)
    b1 = jnp.zeros((C_OUT,), dtype=jnp.float32)
    # network2: default PyTorch init -> deterministic uniform stand-in.
    bound = 1.0 / jnp.sqrt(float(K_DIM))
    w2 = jax.random.uniform(k2, (K_DIM, C_OUT), jnp.float32, -bound, bound)
    b2 = jax.random.uniform(k3, (C_OUT,), jnp.float32, -bound, bound)
    return w1, b1, w2, b2


if __name__ == "__main__":
    key = jax.random.PRNGKey(0)
    kx, kp = jax.random.split(key)

    # N=2, C=1, 36x36 spatial -> 8x8 conv output per image -> R = 128 rows.
    x = jax.random.normal(kx, (2, 1, 36, 36), dtype=jnp.float32)
    w1, b1, w2, b2 = _init_params(kp)

    out, packed = agent_forward(x, w1, b1, w2, b2)
    jax.block_until_ready((out, packed))

    n, _, h, w = x.shape
    oh = (h - KH) // STRIDE + 1
    ow = (w - KW) // STRIDE + 1

    # (1) Module contract: forward returns the input unchanged.
    assert jnp.array_equal(out, x)

    packed_f32 = packed.astype(jnp.float32)
    x1, x2, x3, x4 = unpack_intermediates(packed_f32, n, oh, ow)

    # (2) Layout check: x1 vs f32 lax conv (loose tol; kernel uses bf16 in/out).
    ref1 = lax.conv_general_dilated(
        x, jnp.transpose(w1.reshape(KH, KW, C_IN, C_OUT), (3, 2, 0, 1)),
        window_strides=(STRIDE, STRIDE), padding='VALID',
        dimension_numbers=('NCHW', 'OIHW', 'NCHW')) + b1.reshape(1, C_OUT, 1, 1)
    assert jnp.allclose(x1, ref1, atol=1e-1, rtol=1e-1)

    # (3) Full fused pipeline vs a jnp reference using the same bf16-rounded
    #     inputs (tolerance covers the bf16 output rounding).
    pt = _im2col(x).astype(jnp.bfloat16).astype(jnp.float32)
    wfr = jnp.concatenate([w1, w2], axis=1).astype(jnp.bfloat16).astype(jnp.float32)
    bias_r = jnp.concatenate([b1, b2], axis=0)[None, :]
    conv = pt @ wfr
    x12 = conv + bias_r
    mu = jnp.mean(x12, axis=0, keepdims=True)
    var = jnp.mean((x12 - mu) ** 2, axis=0, keepdims=True)
    x34 = (x12 - mu) * lax.rsqrt(var + BN_EPS)
    ref_packed = jnp.concatenate([x12, x34], axis=1)
    assert jnp.allclose(packed_f32, ref_packed, atol=3e-2, rtol=3e-2)

    print("KERNEL_OK")
</pallas_src>

<mosaic_0001>
module attributes {stable_mosaic.version = 11 : i64} {
  func.func @kernel(%arg0: i32, %arg1: i32, %arg2: memref<128x64xbf16, #tpu.memory_space<vmem>>, %arg3: memref<64x128xbf16, #tpu.memory_space<vmem>>, %arg4: memref<1x128xf32, #tpu.memory_space<vmem>>, %arg5: memref<128x128xbf16, #tpu.memory_space<vmem>>, %arg6: memref<1x128xf32, #tpu.memory_space<vmem>>, %arg7: memref<1x128xf32, #tpu.memory_space<vmem>>, %arg8: memref<1x128xf32, #tpu.memory_space<vmem>>, %arg9: memref<1x128xf32, #tpu.memory_space<vmem>>) attributes {dimension_semantics = [#tpu.dimension_semantics<arbitrary>, #tpu.dimension_semantics<arbitrary>], iteration_bounds = array<i64: 2, 1>, scalar_prefetch = 0 : i64, scratch_operands = 4 : i64, tpu.core_type = #tpu.core_type<tc>, window_params = [{transform_indices = @transform_0, window_bounds = array<i64: 128, 64>}, {pipeline_mode = #tpu.pipeline_mode<synchronous>, transform_indices = @transform_1, window_bounds = array<i64: 64, 128>}, {pipeline_mode = #tpu.pipeline_mode<synchronous>, transform_indices = @transform_2, window_bounds = array<i64: 1, 128>}, {transform_indices = @transform_3, window_bounds = array<i64: 128, 128>}]} {
    %c0_i32 = arith.constant 0 : i32
    %0 = arith.cmpi eq, %arg0, %c0_i32 : i32
    %c0_i32_0 = arith.constant 0 : i32
    %1 = arith.cmpi eq, %arg1, %c0_i32_0 : i32
    %2 = arith.andi %0, %1 : i1
    %3 = arith.extui %2 : i1 to i32
    %c0_i32_1 = arith.constant 0 : i32
    %4 = arith.cmpi ne, %3, %c0_i32_1 : i32
    scf.if %4 {
      %cst_11 = arith.constant 0.000000e+00 : f32
      %19 = vector.broadcast %cst_11 : f32 to vector<1x128xf32>
      %c0_12 = arith.constant 0 : index
      %c0_13 = arith.constant 0 : index
      %20 = vector.load %arg6[%c0_12, %c0_13] : memref<1x128xf32, #tpu.memory_space<vmem>>, vector<1x128xf32>
      tpu.vector_store %arg6[%c0_12, %c0_13], %19 {strides = array<i32>} : memref<1x128xf32, #tpu.memory_space<vmem>>, vector<1x128xf32>,
      %cst_14 = arith.constant 0.000000e+00 : f32
      %21 = vector.broadcast %cst_14 : f32 to vector<1x128xf32>
      %c0_15 = arith.constant 0 : index
      %c0_16 = arith.constant 0 : index
      %22 = vector.load %arg7[%c0_15, %c0_16] : memref<1x128xf32, #tpu.memory_space<vmem>>, vector<1x128xf32>
      tpu.vector_store %arg7[%c0_15, %c0_16], %21 {strides = array<i32>} : memref<1x128xf32, #tpu.memory_space<vmem>>, vector<1x128xf32>,
    } else {
    }
    %c0 = arith.constant 0 : index
    %c0_2 = arith.constant 0 : index
    %5 = vector.load %arg2[%c0, %c0_2] : memref<128x64xbf16, #tpu.memory_space<vmem>>, vector<128x64xbf16>
    %c0_3 = arith.constant 0 : index
    %c0_4 = arith.constant 0 : index
    %6 = vector.load %arg3[%c0_3, %c0_4] : memref<64x128xbf16, #tpu.memory_space<vmem>>, vector<64x128xbf16>
    %cst = arith.constant dense<0.000000e+00> : vector<128x128xf32>
    %7 = tpu.matmul %5, %6, %cst {dimension_numbers = #tpu.dot_dimension_numbers<[1], [0], [0], [1], [0, 0, 1, 1], [], []>} : vector<128x64xbf16>, vector<64x128xbf16>, vector<128x128xf32> -> vector<128x128xf32>
    %c0_i32_5 = arith.constant 0 : i32
    %8 = arith.cmpi eq, %arg0, %c0_i32_5 : i32
    %9 = arith.extui %8 : i1 to i32
    %c0_i32_6 = arith.constant 0 : i32
    %10 = arith.cmpi ne, %9, %c0_i32_6 : i32
    scf.if %10 {
      %c0_11 = arith.constant 0 : index
      %c0_12 = arith.constant 0 : index
      %19 = vector.load %arg6[%c0_11, %c0_12] : memref<1x128xf32, #tpu.memory_space<vmem>>, vector<1x128xf32>
      %cst_13 = arith.constant dense<0.000000e+00> : vector<128xf32>
      %20 = vector.multi_reduction <add>, %7, %cst_13 [0] : vector<128x128xf32> to vector<128xf32>
      %21 = vector.shape_cast %20 : vector<128xf32> to vector<1x128xf32>
      %22 = arith.addf %19, %21 : vector<1x128xf32>
      %c0_14 = arith.constant 0 : index
      %c0_15 = arith.constant 0 : index
      %23 = vector.load %arg6[%c0_14, %c0_15] : memref<1x128xf32, #tpu.memory_space<vmem>>, vector<1x128xf32>
      tpu.vector_store %arg6[%c0_14, %c0_15], %22 {strides = array<i32>} : memref<1x128xf32, #tpu.memory_space<vmem>>, vector<1x128xf32>,
      %c0_16 = arith.constant 0 : index
      %c0_17 = arith.constant 0 : index
      %24 = vector.load %arg7[%c0_16, %c0_17] : memref<1x128xf32, #tpu.memory_space<vmem>>, vector<1x128xf32>
      %25 = arith.mulf %7, %7 : vector<128x128xf32>
      %cst_18 = arith.constant dense<0.000000e+00> : vector<128xf32>
      %26 = vector.multi_reduction <add>, %25, %cst_18 [0] : vector<128x128xf32> to vector<128xf32>
      %27 = vector.shape_cast %26 : vector<128xf32> to vector<1x128xf32>
      %28 = arith.addf %24, %27 : vector<1x128xf32>
      %c0_19 = arith.constant 0 : index
      %c0_20 = arith.constant 0 : index
      %29 = vector.load %arg7[%c0_19, %c0_20] : memref<1x128xf32, #tpu.memory_space<vmem>>, vector<1x128xf32>
      tpu.vector_store %arg7[%c0_19, %c0_20], %28 {strides = array<i32>} : memref<1x128xf32, #tpu.memory_space<vmem>>, vector<1x128xf32>,
    } else {
    }
    %c1_i32 = arith.constant 1 : i32
    %11 = arith.cmpi eq, %arg0, %c1_i32 : i32
    %c0_i32_7 = arith.constant 0 : i32
    %12 = arith.cmpi eq, %arg1, %c0_i32_7 : i32
    %13 = arith.andi %11, %12 : i1
    %14 = arith.extui %13 : i1 to i32
    %c0_i32_8 = arith.constant 0 : i32
    %15 = arith.cmpi ne, %14, %c0_i32_8 : i32
    scf.if %15 {
      %c0_11 = arith.constant 0 : index
      %c0_12 = arith.constant 0 : index
      %19 = vector.load %arg6[%c0_11, %c0_12] : memref<1x128xf32, #tpu.memory_space<vmem>>, vector<1x128xf32>
      %cst_13 = arith.constant 7.812500e-03 : f32
      %20 = vector.broadcast %cst_13 : f32 to vector<1x128xf32>
      %21 = arith.mulf %19, %20 : vector<1x128xf32>
      %c0_14 = arith.constant 0 : index
      %c0_15 = arith.constant 0 : index
      %22 = vector.load %arg7[%c0_14, %c0_15] : memref<1x128xf32, #tpu.memory_space<vmem>>, vector<1x128xf32>
      %cst_16 = arith.constant 7.812500e-03 : f32
      %23 = vector.broadcast %cst_16 : f32 to vector<1x128xf32>
      %24 = arith.mulf %22, %23 : vector<1x128xf32>
      %25 = arith.mulf %21, %21 : vector<1x128xf32>
      %26 = arith.subf %24, %25 : vector<1x128xf32>
      %cst_17 = arith.constant 0.000000e+00 : f32
      %27 = vector.broadcast %cst_17 : f32 to vector<1x128xf32>
      %28 = arith.maximumf %26, %27 : vector<1x128xf32>
      %cst_18 = arith.constant 9.99999974E-6 : f32
      %29 = vector.broadcast %cst_18 : f32 to vector<1x128xf32>
      %30 = arith.addf %28, %29 : vector<1x128xf32>
      %31 = math.rsqrt %30 : vector<1x128xf32>
      %32 = tpu.iota {dimensions = array<i32: 1>} : vector<1x128xi32>
      %c64_i32 = arith.constant 64 : i32
      %33 = vector.broadcast %c64_i32 : i32 to vector<1x128xi32>
      %34 = arith.cmpi sge, %32, %33 : vector<1x128xi32>
      %cst_19 = arith.constant 1.000000e+00 : f32
      %35 = vector.broadcast %cst_19 : f32 to vector<1x128xf32>
      %36 = arith.select %34, %31, %35 : vector<1x128xi1>, vector<1x128xf32>
      %c0_20 = arith.constant 0 : index
      %c0_21 = arith.constant 0 : index
      %37 = vector.load %arg8[%c0_20, %c0_21] : memref<1x128xf32, #tpu.memory_space<vmem>>, vector<1x128xf32>
      tpu.vector_store %arg8[%c0_20, %c0_21], %36 {strides = array<i32>} : memref<1x128xf32, #tpu.memory_space<vmem>>, vector<1x128xf32>,
      %cst_22 = arith.constant 0.000000e+00 : f32
      %38 = vector.broadcast %cst_22 : f32 to vector<1x128xf32>
      %39 = arith.subf %38, %21 : vector<1x128xf32>
      %40 = arith.mulf %39, %31 : vector<1x128xf32>
      %c0_23 = arith.constant 0 : index
      %c0_24 = arith.constant 0 : index
      %41 = vector.load %arg4[%c0_23, %c0_24] : memref<1x128xf32, #tpu.memory_space<vmem>>, vector<1x128xf32>
      %42 = arith.select %34, %40, %41 : vector<1x128xi1>, vector<1x128xf32>
      %c0_25 = arith.constant 0 : index
      %c0_26 = arith.constant 0 : index
      %43 = vector.load %arg9[%c0_25, %c0_26] : memref<1x128xf32, #tpu.memory_space<vmem>>, vector<1x128xf32>
      tpu.vector_store %arg9[%c0_25, %c0_26], %42 {strides = array<i32>} : memref<1x128xf32, #tpu.memory_space<vmem>>, vector<1x128xf32>,
    } else {
    }
    %c1_i32_9 = arith.constant 1 : i32
    %16 = arith.cmpi eq, %arg0, %c1_i32_9 : i32
    %17 = arith.extui %16 : i1 to i32
    %c0_i32_10 = arith.constant 0 : i32
    %18 = arith.cmpi ne, %17, %c0_i32_10 : i32
    scf.if %18 {
      %c0_11 = arith.constant 0 : index
      %c0_12 = arith.constant 0 : index
      %19 = vector.load %arg8[%c0_11, %c0_12] : memref<1x128xf32, #tpu.memory_space<vmem>>, vector<1x128xf32>
      %20 = vector.broadcast %19 : vector<1x128xf32> to vector<128x128xf32>
      %21 = arith.mulf %7, %20 : vector<128x128xf32>
      %c0_13 = arith.constant 0 : index
      %c0_14 = arith.constant 0 : index
      %22 = vector.load %arg9[%c0_13, %c0_14] : memref<1x128xf32, #tpu.memory_space<vmem>>, vector<1x128xf32>
      %23 = vector.broadcast %22 : vector<1x128xf32> to vector<128x128xf32>
      %24 = arith.addf %21, %23 : vector<128x128xf32>
      %25 = arith.truncf %24 : vector<128x128xf32> to vector<128x128xbf16>
      %c0_15 = arith.constant 0 : index
      %c0_16 = arith.constant 0 : index
      %26 = vector.load %arg5[%c0_15, %c0_16] : memref<128x128xbf16, #tpu.memory_space<vmem>>, vector<128x128xbf16>
      tpu.vector_store %arg5[%c0_15, %c0_16], %25 {strides = array<i32>} : memref<128x128xbf16, #tpu.memory_space<vmem>>, vector<128x128xbf16>,
    } else {
    }
    return
  }
  func.func @transform_0(%arg0: i32, %arg1: i32) -> (i32, i32) {
    %c0_i32 = arith.constant 0 : i32
    %c0_i32_0 = arith.constant 0 : i32
    return %arg1, %c0_i32 : i32, i32
  }
  func.func @transform_1(%arg0: i32, %arg1: i32) -> (i32, i32) {
    %c0_i32 = arith.constant 0 : i32
    %c0_i32_0 = arith.constant 0 : i32
    %c0_i32_1 = arith.constant 0 : i32
    return %c0_i32, %c0_i32_0 : i32, i32
  }
  func.func @transform_2(%arg0: i32, %arg1: i32) -> (i32, i32) {
    %c0_i32 = arith.constant 0 : i32
    %c0_i32_0 = arith.constant 0 : i32
    %c0_i32_1 = arith.constant 0 : i32
    return %c0_i32, %c0_i32_0 : i32, i32
  }
  func.func @transform_3(%arg0: i32, %arg1: i32) -> (i32, i32) {
    %0 = arith.muli %arg1, %arg0 : i32
    %c0_i32 = arith.constant 0 : i32
    %c0_i32_0 = arith.constant 0 : i32
    return %0, %c0_i32 : i32, i32
  }
}

</mosaic_0001>

<llo_original>
// kernel: agent_forward.1
$region0: #{agent_forward.1}
  #allocation0 [shape = 'u32[]', space=smem, size = 0x4, offset = 0x4, fixed_abs, tag = 'smem constant byte address 0x4 - core index']
  #allocation1 [shape = 'u32[144,128]{1,0:T(1,128)}', space=vmem, size = 0x12000, scoped, tag = 'internal scratch']
  #allocation2 [shape = 'f32[1,128]{1,0:T(1,128)}', space=vmem, size = 0x200, scoped, tag = 'scratch operand']
  #allocation3 [shape = 'f32[1,128]{1,0:T(1,128)}', space=vmem, size = 0x200, scoped, tag = 'scratch operand']
  #allocation4 [shape = 'f32[1,128]{1,0:T(1,128)}', space=vmem, size = 0x200, scoped, tag = 'scratch operand']
  #allocation5 [shape = 'f32[1,128]{1,0:T(1,128)}', space=vmem, size = 0x200, scoped, tag = 'scratch operand']
  %s0 = inlined_call_operand.vmem [shape: bf16[128,64], index: 0, kind: input, shape index: {}]
  %s1 = inlined_call_operand.vmem [shape: bf16[64,128], index: 1, kind: input, shape index: {}]
  %s2 = inlined_call_operand.vmem [shape: f32[1,128], index: 2, kind: input, shape index: {}]
  %s3 = inlined_call_operand.hbm [shape: bf16[128,128], index: 3, kind: output, shape index: {}]
  %s4 = sld [smem:[#allocation0]]
  $region61: #{agent_forward.1} parent=0
    _
  %s6 = ssub.s32 1, %s4
  %s7 = scalar_select 0, %s6, %s4
  $region1: #{agent_forward.1} parent=0
    #allocation6 [shape = 'u8[65536]{0}', space=vmem, size = 0x10000, scoped, tag = 'output window, operand 0']
    #allocation7 [shape = 's32[2]{0}', space=sflag, size = 0x8, scoped, tag = 'scoped memory for agent_forward.1']
    %8 = vsyncpa [#allocation7], 0
    %s9 = scalar_lea.sflag [#allocation7], 1
    %10 = vsyncpa %s9, 0
    loop: start=0, step=1, limit=4
    $region2: #{agent_forward.1} parent=1 // loop_pre_header
      _
    $region3: #{agent_forward.1} parent=1 // loop_header
      %s12 = sphi 0, %s16
      %p13 = scmp.ge.s32.totalorder %s12, 4
      %s19 = sphi 0, %s31
      %s20 = sphi 0, %s27
      %s21 = sphi 0, %s19
      %s22 = sphi 0, %s20
      %s23 = sphi 0, %s21
      %s24 = sphi 0, %s22
      %s34 = sphi 0, %s36
      %s37 = sphi 0, %s34
      %s38 = sphi 0, %s37
      %s54 = sphi 0, %s38
      %s58 = sphi 0, %s58
      %s60 = sphi 0, %s58
      %s61 = sphi 0, %s60
      %s75 = sphi 0, %s61
      %s79 = sphi 0, %s79
      %s81 = sphi 0, %s79
      %s82 = sphi 0, %s81
      %s96 = sphi 0, %s82
      %s104 = sphi 0, %s106
      %s107 = sphi 0, %s104
      %s108 = sphi 0, %s107
      %s124 = sphi 0, %s108
    $region4: #{agent_forward.1} parent=1 // loop_header_branch
      %15 = sbr.rel (%p13) target = $region8
    $region5: #{agent_forward.1} parent=1 // loop_body
      %s17 = ssub.s32 %s12, 1
      %s18 = ssub.s32 %s12, 2
      %s25 = sadd.s32 1, %s20
      %p26 = scmp.ge.s32.totalorder %s25, 1
      %s27 = scalar_select %p26, 0, %s25
      %s28 = sadd.s32 1, %s19
      %s29 = scalar_select %p26, %s28, %s19
      %p30 = scmp.ge.s32.totalorder %s29, 2
      %s31 = scalar_select %p30, 0, %s29
      %s32 = ssub.s32 %s20, %s27
      %p33 = scmp.eq.s32.totalorder %s32, 0
      %s35 = sadd.s32 %s34, 1
      %s36 = scalar_select %p33, %s34, %s35
      %p39 = pneg %p33
      %p40 = scmp.eq.s32.totalorder %s12, 1
      %p41 = por %p39, %p40
      %p42 = scmp.ne.s32.totalorder %s34, %s37
      %p43 = scmp.eq.s32.totalorder %s12, 0
      %p44 = por %p42, %p43
      %p45 = scmp.ne.s32.totalorder %s34, %s37
      %p46 = scmp.eq.s32.totalorder %s17, 1
      %p47 = por %p45, %p46
      %p48 = scmp.ne.s32.totalorder %s37, %s38
      %p49 = scmp.eq.s32.totalorder %s17, 0
      %p50 = por %p48, %p49
      %p51 = scmp.ne.s32.totalorder %s37, %s38
      %p52 = scmp.eq.s32.totalorder %s18, 1
      %p53 = por %p51, %p52
      %p55 = scmp.ne.s32.totalorder %s38, %s54
      %p56 = scmp.eq.s32.totalorder %s18, 0
      %p57 = por %p55, %p56
      %s59 = sadd.s32 %s58, 1
      %p62 = scmp.eq.s32.totalorder %s12, 1
      %p63 = scmp.ne.s32.totalorder %s58, %s60
      %p64 = scmp.eq.s32.totalorder %s12, 0
      %p65 = por %p63, %p64
      %p66 = scmp.ne.s32.totalorder %s58, %s60
      %p67 = scmp.eq.s32.totalorder %s17, 1
      %p68 = por %p66, %p67
      %p69 = scmp.ne.s32.totalorder %s60, %s61
      %p70 = scmp.eq.s32.totalorder %s17, 0
      %p71 = por %p69, %p70
      %p72 = scmp.ne.s32.totalorder %s60, %s61
      %p73 = scmp.eq.s32.totalorder %s18, 1
      %p74 = por %p72, %p73
      %p76 = scmp.ne.s32.totalorder %s61, %s75
      %p77 = scmp.eq.s32.totalorder %s18, 0
      %p78 = por %p76, %p77
      %s80 = sadd.s32 %s79, 1
      %p83 = scmp.eq.s32.totalorder %s12, 1
      %p84 = scmp.ne.s32.totalorder %s79, %s81
      %p85 = scmp.eq.s32.totalorder %s12, 0
      %p86 = por %p84, %p85
      %p87 = scmp.ne.s32.totalorder %s79, %s81
      %p88 = scmp.eq.s32.totalorder %s17, 1
      %p89 = por %p87, %p88
      %p90 = scmp.ne.s32.totalorder %s81, %s82
      %p91 = scmp.eq.s32.totalorder %s17, 0
      %p92 = por %p90, %p91
      %p93 = scmp.ne.s32.totalorder %s81, %s82
      %p94 = scmp.eq.s32.totalorder %s18, 1
      %p95 = por %p93, %p94
      %p97 = scmp.ne.s32.totalorder %s82, %s96
      %p98 = scmp.eq.s32.totalorder %s18, 0
      %p99 = por %p97, %p98
      %s100 = smul.u32 %s20, %s19
      %s101 = smul.u32 %s27, %s31
      %s102 = ssub.s32 %s100, %s101
      %p103 = scmp.eq.s32.totalorder %s102, 0
      %s105 = sadd.s32 %s104, 1
      %s106 = scalar_select %p103, %s104, %s105
      %p109 = pneg %p103
      %p110 = scmp.eq.s32.totalorder %s12, 1
      %p111 = por %p109, %p110
      %p112 = scmp.ne.s32.totalorder %s104, %s107
      %p113 = scmp.eq.s32.totalorder %s12, 0
      %p114 = por %p112, %p113
      %p115 = scmp.ne.s32.totalorder %s104, %s107
      %p116 = scmp.eq.s32.totalorder %s17, 1
      %p117 = por %p115, %p116
      %p118 = scmp.ne.s32.totalorder %s107, %s108
      %p119 = scmp.eq.s32.totalorder %s17, 0
      %p120 = por %p118, %p119
      %p121 = scmp.ne.s32.totalorder %s107, %s108
      %p122 = scmp.eq.s32.totalorder %s18, 1
      %p123 = por %p121, %p122
      %p125 = scmp.ne.s32.totalorder %s108, %s124
      %p126 = scmp.eq.s32.totalorder %s18, 0
      %p127 = por %p125, %p126
      %p128 = scmp.le.s32.totalorder 1, %s12
      %p129 = scmp.lt.s32.totalorder %s12, 3
      %p130 = pnand %p128, %p129
      %p131 = pneg %p130
      // Predicated region
      $region9: #{agent_forward.1} parent=5 // pred_check
        _
      $region10: #{agent_forward.1} parent=5 // pred_check_branch
        %133 = sbr.rel (%p130) target = $region12
      $region11: #{agent_forward.1} parent=5 // pred_region
        %s134 = ssub.s32 %s12, 1
        // Predicated region
        $region13: #{agent_forward.1} parent=11 // pred_check
          %p135 = pneg %p50
        $region14: #{agent_forward.1} parent=11 // pred_check_branch
          %137 = sbr.rel (%p135) target = $region16
        $region15: #{agent_forward.1} parent=11 // pred_region
          %s138 = smul.u32 16, %s22
          %p139 = scmp.lt.s32.totalorder %s138, 15
          %s140 = scalar_select %p139, %s138, 15
          %s141 = smul.addr %s140, 4
          %s142 = scalar_lea.vmem %s0, %s141
          %s143 = smul.u32 16, %s22
        $region16: #{agent_forward.1} parent=11 // pred_fallthru
          _
        // Predicated region
        $region17: #{agent_forward.1} parent=11 // pred_check
          %p144 = pneg %p71
        $region18: #{agent_forward.1} parent=11 // pred_check_branch
          %146 = sbr.rel (%p144) target = $region20
        $region19: #{agent_forward.1} parent=11 // pred_region
          _
        $region20: #{agent_forward.1} parent=11 // pred_fallthru
          _
        // Predicated region
        $region21: #{agent_forward.1} parent=11 // pred_check
          %p147 = pneg %p92
        $region22: #{agent_forward.1} parent=11 // pred_check_branch
          %149 = sbr.rel (%p147) target = $region24
        $region23: #{agent_forward.1} parent=11 // pred_region
          _
        $region24: #{agent_forward.1} parent=11 // pred_fallthru
          _
      $region12: #{agent_forward.1} parent=5 // pred_fallthru
        _
      %p150 = scmp.lt.s32.totalorder %s12, 2
      // Predicated region
      $region25: #{agent_forward.1} parent=5 // pred_check
        %p151 = pneg %p150
      $region26: #{agent_forward.1} parent=5 // pred_check_branch
        %153 = sbr.rel (%p151) target = $region28
      $region27: #{agent_forward.1} parent=5 // pred_region
        _
      $region28: #{agent_forward.1} parent=5 // pred_fallthru
        _
      %p154 = scmp.le.s32.totalorder 1, %s12
      %p155 = scmp.lt.s32.totalorder %s12, 3
      %p156 = pnand %p154, %p155
      %p157 = pneg %p156
      // Predicated region
      $region29: #{agent_forward.1} parent=5 // pred_check
        _
      $region30: #{agent_forward.1} parent=5 // pred_check_branch
        %159 = sbr.rel (%p156) target = $region32
      $region31: #{agent_forward.1} parent=5 // pred_region
        %s160 = ssub.s32 %s12, 1
        %s161 = smul.u32 16, %s22
        %p162 = scmp.lt.s32.totalorder %s161, 15
        %s163 = scalar_select %p162, %s161, 15
        %s164 = smul.addr %s163, 4
        %s165 = scalar_lea.vmem %s0, %s164
        %p166 = pneg %p50
        %p167 = pneg %p47
        %p168 = pneg %p71
        %p169 = pneg %p68
        %p170 = pneg %p92
        %p171 = pneg %p89
        %p172 = pneg %p120
        %p173 = pneg %p117
        %s174 = sand.u32 %s107, 1
        %s175 = scalar_lea.sflag [#allocation7], %s174
        %s176 = sand.u32 %s107, 1
        %s177 = smul.addr %s176, 64
        %s178 = scalar_lea.vmem [#allocation6], %s177
        %s179 = smul.u32 16, %s22
        %p180 = scmp.lt.s32.totalorder %s179, 15
        %s181 = scalar_select %p180, %s179, 15
        %s182 = smul.addr %s181, 4
        %s183 = scalar_lea.vmem %s0, %s182
        %s184 = smul.u32 16, %s22
        %s185 = smul.u32 %s22, %s21
        %s186 = smul.u32 16, %s185
        %p188 = scmp.eq.s32.totalorder %s21, 0
        %p189 = scmp.eq.s32.totalorder %s22, 0
        %p190 = pnand %p188, %p189
        %p191 = pneg %p190
        // Predicated region
        $region33: #{agent_forward.1} parent=31 // pred_check
          _
        $region34: #{agent_forward.1} parent=31 // pred_check_branch
          %193 = sbr.rel (%p190) target = $region36
        $region35: #{agent_forward.1} parent=31 // pred_region
          %194 = vst [vmem:[#allocation2] sm:$0x1] 0.0
          %195 = vst [vmem:[#allocation3] sm:$0x1] 0.0
        $region36: #{agent_forward.1} parent=31 // pred_fallthru
          _
        %v196 = vld [vmem:[%s183] sm:$0xf]
        %v197 = vld [vmem:[%s183 + $0x4] sm:$0xf]
        %v198 = vld [vmem:[%s183 + $0x8] sm:$0xf]
        %v199 = vld [vmem:[%s183 + $0xc] sm:$0xf]
        %v200 = vld [vmem:[%s183 + $0x10] sm:$0xf]
        %v201 = vld [vmem:[%s183 + $0x14] sm:$0xf]
        %v202 = vld [vmem:[%s183 + $0x18] sm:$0xf]
        %v203 = vld [vmem:[%s183 + $0x1c] sm:$0xf]
        %v204 = vld [vmem:[%s183 + $0x20] sm:$0xf]
        %v205 = vld [vmem:[%s183 + $0x24] sm:$0xf]
        %v206 = vld [vmem:[%s183 + $0x28] sm:$0xf]
        %v207 = vld [vmem:[%s183 + $0x2c] sm:$0xf]
        %v208 = vld [vmem:[%s183 + $0x30] sm:$0xf]
        %v209 = vld [vmem:[%s183 + $0x34] sm:$0xf]
        %v210 = vld [vmem:[%s183 + $0x38] sm:$0xf]
        %v211 = vld [vmem:[%s183 + $0x3c] sm:$0xf]
        %v212 = vld [vmem:[%s1] sm:$0xf]
        %v213 = vld [vmem:[%s1 + $0x4] sm:$0xf]
        %v214 = vld [vmem:[%s1 + $0x8] sm:$0xf]
        %v215 = vld [vmem:[%s1 + $0xc] sm:$0xf]
        %v216 = vld [vmem:[%s1 + $0x10] sm:$0xf]
        %v217 = vld [vmem:[%s1 + $0x14] sm:$0xf]
        %v218 = vld [vmem:[%s1 + $0x18] sm:$0xf]
        %v219 = vld [vmem:[%s1 + $0x1c] sm:$0xf]
        %v236 = vunpack.c.l.b16 %v196
        %v237 = vunpack.c.l.b16 %v197
        %v238 = vunpack.c.l.b16 %v198
        %v239 = vunpack.c.l.b16 %v199
        %v240 = vunpack.c.l.b16 %v200
        %v241 = vunpack.c.l.b16 %v201
        %v242 = vunpack.c.l.b16 %v202
        %v243 = vunpack.c.l.b16 %v203
        %v244 = vunpack.c.l.b16 %v204
        %v245 = vunpack.c.l.b16 %v205
        %v246 = vunpack.c.l.b16 %v206
        %v247 = vunpack.c.l.b16 %v207
        %v248 = vunpack.c.l.b16 %v208
        %v249 = vunpack.c.l.b16 %v209
        %v250 = vunpack.c.l.b16 %v210
        %v251 = vunpack.c.l.b16 %v211
        %v252 = vpack.c.b16 %v237, %v236
        %v253 = vpack.c.b16 %v239, %v238
        %v254 = vpack.c.b16 %v241, %v240
        %v255 = vpack.c.b16 %v243, %v242
        %v256 = vpack.c.b16 %v245, %v244
        %v257 = vpack.c.b16 %v247, %v246
        %v258 = vpack.c.b16 %v249, %v248
        %v259 = vpack.c.b16 %v251, %v250
        %v268 = vunpack.c.l.b16 %v212
        %v269 = vunpack.c.l.b16 %v213
        %v270 = vunpack.c.l.b16 %v214
        %v271 = vunpack.c.l.b16 %v215
        %v272 = vunpack.c.l.b16 %v216
        %v273 = vunpack.c.l.b16 %v217
        %v274 = vunpack.c.l.b16 %v218
        %v275 = vunpack.c.l.b16 %v219
        %v276 = vpack.c.b16 %v269, %v268
        %v277 = vpack.c.b16 %v271, %v270
        %v278 = vpack.c.b16 %v273, %v272
        %v279 = vpack.c.b16 %v275, %v274
        %vm284 = vcmask 523264
        %v286 = vsel %vm284, %v252, 0
        %v289 = vsel %vm284, %v253, 0
        %v292 = vsel %vm284, %v254, 0
        %v295 = vsel %vm284, %v255, 0
        %v298 = vsel %vm284, %v256, 0
        %v301 = vsel %vm284, %v257, 0
        %v304 = vsel %vm284, %v258, 0
        %v307 = vsel %vm284, %v259, 0
        %309 = vmatprep.subr.bf16.mxu0 0
        %310 = vmatpush1.bf16.msra.mxu0 %v276
        %311 = vmatprep.subr.bf16.mxu0 0
        %312 = vmatpush1.bf16.msra.mxu0 %v277
        %313 = vmatprep.subr.bf16.mxu0 0
        %314 = vmatpush1.bf16.msra.mxu0 %v278
        %315 = vmatprep.subr.bf16.mxu0 0
        %316 = vmatpush1.bf16.msra.mxu0 %v279
        %317 = vmatprep.subr.bf16.mxu0 0
        %318 = vmatpush1.bf16.msra.mxu0 0
        %319 = vmatprep.subr.bf16.mxu0 0
        %320 = vmatpush1.bf16.msra.mxu0 0
        %321 = vmatprep.subr.bf16.mxu0 0
        %322 = vmatpush1.bf16.msra.mxu0 0
        %323 = vmatprep.subr.bf16.mxu0 0
        %324 = vmatpush1.bf16.msra.mxu0 0
        %325 = vmatprep.subr.bf16.mxu0 0
        %326 = vmatpush1.bf16.msra.mxu0 0
        %327 = vmatprep.subr.bf16.mxu0 0
        %328 = vmatpush1.bf16.msra.mxu0 0
        %329 = vmatprep.subr.bf16.mxu0 0
        %330 = vmatpush1.bf16.msra.mxu0 0
        %331 = vmatprep.subr.bf16.mxu0 0
        %332 = vmatpush1.bf16.msra.mxu0 0
        %333 = vmatprep.subr.bf16.mxu0 0
        %334 = vmatpush1.bf16.msra.mxu0 0
        %335 = vmatprep.subr.bf16.mxu0 0
        %336 = vmatpush1.bf16.msra.mxu0 0
        %337 = vmatprep.subr.bf16.mxu0 0
        %338 = vmatpush1.bf16.msra.mxu0 0
        %339 = vmatprep.subr.bf16.mxu0 0
        %340 = vmatpush1.bf16.msra.mxu0 0
        %341 = vmatprep.mubr.bf16.mxu0 0
        %342 = vmatmul.mubr.bf16.gmra.mrb[0].mxu0 %v286
        %v343 = vpop.f32.mrb[0].mxu0
        %v344 = vadd.f32 0.0, %v343
        %v345 = vpop.f32.mrb[0].mxu0
        %v346 = vpop.f32.mrb[0].mxu0
        %v347 = vadd.f32 0.0, %v346
        %v348 = vpop.f32.mrb[0].mxu0
        %349 = vmatprep.mubr.bf16.mxu0 0
        %350 = vmatmul.mubr.bf16.gmra.mrb[0].mxu0 %v289
        %v351 = vpop.f32.mrb[0].mxu0
        %v352 = vadd.f32 0.0, %v351
        %v353 = vpop.f32.mrb[0].mxu0
        %v354 = vpop.f32.mrb[0].mxu0
        %v355 = vadd.f32 0.0, %v354
        %v356 = vpop.f32.mrb[0].mxu0
        %357 = vmatprep.mubr.bf16.mxu0 0
        %358 = vmatmul.mubr.bf16.gmra.mrb[0].mxu0 %v292
        %v359 = vpop.f32.mrb[0].mxu0
        %v360 = vadd.f32 0.0, %v359
        %v361 = vpop.f32.mrb[0].mxu0
        %v362 = vpop.f32.mrb[0].mxu0
        %v363 = vadd.f32 0.0, %v362
        %v364 = vpop.f32.mrb[0].mxu0
        %365 = vmatprep.mubr.bf16.mxu0 0
        %366 = vmatmul.mubr.bf16.gmra.mrb[0].mxu0 %v295
        %v367 = vpop.f32.mrb[0].mxu0
        %v368 = vadd.f32 0.0, %v367
        %v369 = vpop.f32.mrb[0].mxu0
        %v370 = vpop.f32.mrb[0].mxu0
        %v371 = vadd.f32 0.0, %v370
        %v372 = vpop.f32.mrb[0].mxu0
        %373 = vmatprep.mubr.bf16.mxu0 0
        %374 = vmatmul.mubr.bf16.gmra.mrb[0].mxu0 %v298
        %v375 = vpop.f32.mrb[0].mxu0
        %v376 = vadd.f32 0.0, %v375
        %v377 = vpop.f32.mrb[0].mxu0
        %v378 = vpop.f32.mrb[0].mxu0
        %v379 = vadd.f32 0.0, %v378
        %v380 = vpop.f32.mrb[0].mxu0
        %381 = vmatprep.mubr.bf16.mxu0 0
        %382 = vmatmul.mubr.bf16.gmra.mrb[0].mxu0 %v301
        %v383 = vpop.f32.mrb[0].mxu0
        %v384 = vadd.f32 0.0, %v383
        %v385 = vpop.f32.mrb[0].mxu0
        %v386 = vpop.f32.mrb[0].mxu0
        %v387 = vadd.f32 0.0, %v386
        %v388 = vpop.f32.mrb[0].mxu0
        %389 = vmatprep.mubr.bf16.mxu0 0
        %390 = vmatmul.mubr.bf16.gmra.mrb[0].mxu0 %v304
        %v391 = vpop.f32.mrb[0].mxu0
        %v392 = vadd.f32 0.0, %v391
        %v393 = vpop.f32.mrb[0].mxu0
        %v394 = vpop.f32.mrb[0].mxu0
        %v395 = vadd.f32 0.0, %v394
        %v396 = vpop.f32.mrb[0].mxu0
        %397 = vmatprep.mubr.bf16.mxu0 0
        %398 = vmatmul.mubr.bf16.gmra.mrb[0].mxu0 %v307
        %v399 = vpop.f32.mrb[0].mxu0
        %v400 = vadd.f32 0.0, %v399
        %v401 = vpop.f32.mrb[0].mxu0
        %v402 = vpop.f32.mrb[0].mxu0
        %v403 = vadd.f32 0.0, %v402
        %v404 = vpop.f32.mrb[0].mxu0
        %405 = vdwg.mxu0
        // Predicated region
        $region37: #{agent_forward.1} parent=31 // pred_check
          %p406 = pneg %p188
        $region38: #{agent_forward.1} parent=31 // pred_check_branch
          %408 = sbr.rel (%p406) target = $region40
        $region39: #{agent_forward.1} parent=31 // pred_region
          %v409 = vld [vmem:[#allocation2] sm:$0x1]
          %v410 = vadd.f32 %v344, %v347
          %v411 = vadd.f32 %v410, %v352
          %v412 = vadd.f32 %v411, %v355
          %v413 = vadd.f32 %v412, %v360
          %v414 = vadd.f32 %v413, %v363
          %v415 = vadd.f32 %v414, %v368
          %v416 = vadd.f32 %v415, %v371
          %v417 = vadd.f32 %v416, %v376
          %v418 = vadd.f32 %v417, %v379
          %v419 = vadd.f32 %v418, %v384
          %v420 = vadd.f32 %v419, %v387
          %v421 = vadd.f32 %v420, %v392
          %v422 = vadd.f32 %v421, %v395
          %v423 = vadd.f32 %v422, %v400
          %v424 = vadd.f32 %v423, %v403
          %v425 = vrot.slane %v424, 4
          %v426 = vadd.f32 %v424, %v425
          %v427 = vrot.slane %v426, 2
          %v428 = vadd.f32 %v426, %v427
          %v429 = vrot.slane %v428, 1
          %v430 = vadd.f32 %v428, %v429
          %v431 = vadd.f32 %v409, %v430
          %432 = vst [vmem:[#allocation2] sm:$0x1] %v431
          %v433 = vld [vmem:[#allocation3] sm:$0x1]
          %v434 = vmul.f32 %v344, %v344
          %v435 = vmul.f32 %v347, %v347
          %v436 = vmul.f32 %v352, %v352
          %v437 = vmul.f32 %v355, %v355
          %v438 = vmul.f32 %v360, %v360
          %v439 = vmul.f32 %v363, %v363
          %v440 = vmul.f32 %v368, %v368
          %v441 = vmul.f32 %v371, %v371
          %v442 = vmul.f32 %v376, %v376
          %v443 = vmul.f32 %v379, %v379
          %v444 = vmul.f32 %v384, %v384
          %v445 = vmul.f32 %v387, %v387
          %v446 = vmul.f32 %v392, %v392
          %v447 = vmul.f32 %v395, %v395
          %v448 = vmul.f32 %v400, %v400
          %v449 = vmul.f32 %v403, %v403
          %v450 = vadd.f32 %v434, %v435
          %v451 = vadd.f32 %v450, %v436
          %v452 = vadd.f32 %v451, %v437
          %v453 = vadd.f32 %v452, %v438
          %v454 = vadd.f32 %v453, %v439
          %v455 = vadd.f32 %v454, %v440
          %v456 = vadd.f32 %v455, %v441
          %v457 = vadd.f32 %v456, %v442
          %v458 = vadd.f32 %v457, %v443
          %v459 = vadd.f32 %v458, %v444
          %v460 = vadd.f32 %v459, %v445
          %v461 = vadd.f32 %v460, %v446
          %v462 = vadd.f32 %v461, %v447
          %v463 = vadd.f32 %v462, %v448
          %v464 = vadd.f32 %v463, %v449
          %v465 = vrot.slane %v464, 4
          %v466 = vadd.f32 %v464, %v465
          %v467 = vrot.slane %v466, 2
          %v468 = vadd.f32 %v466, %v467
          %v469 = vrot.slane %v468, 1
          %v470 = vadd.f32 %v468, %v469
          %v471 = vadd.f32 %v433, %v470
          %472 = vst [vmem:[#allocation3] sm:$0x1] %v471
        $region40: #{agent_forward.1} parent=31 // pred_fallthru
          _
        %p473 = scmp.eq.s32.totalorder %s21, 1
        %p474 = pnand %p473, %p189
        %p475 = pneg %p474
        // Predicated region
        $region41: #{agent_forward.1} parent=31 // pred_check
          _
        $region42: #{agent_forward.1} parent=31 // pred_check_branch
          %477 = sbr.rel (%p474) target = $region44
        $region43: #{agent_forward.1} parent=31 // pred_region
          %v478 = vld [vmem:[#allocation2] sm:$0x1]
          %v479 = vmul.f32 %v478, 0.0078125
          %v480 = vld [vmem:[#allocation3] sm:$0x1]
          %v481 = vmul.f32 %v480, 0.0078125
          %v482 = vmul.f32 %v479, %v479
          %v483 = vsub.f32 %v481, %v482
          %v484 = vmax.f32 %v483, 0.0
          %v485 = vadd.f32 %v484, 1e-05
          %v486 = vrsqrt.pop %v485
          %v487 = vlaneseq
          %v488 = vand.u32 %v487, 127
          %vm489 = vcmp.ge.s32.totalorder %v488, 64
          %v490 = vsel %vm489, %v486, 1.0
          %491 = vst [vmem:[#allocation4] sm:$0x1] %v490
          %v492 = vsub.f32 0.0, %v479
          %v493 = vmul.f32 %v492, %v486
          %v494 = vld [vmem:[%s2] sm:$0x1]
          %v495 = vsel %vm489, %v493, %v494
          %496 = vst [vmem:[#allocation5] sm:$0x1] %v495
        $region44: #{agent_forward.1} parent=31 // pred_fallthru
          _
        // Predicated region
        $region45: #{agent_forward.1} parent=31 // pred_check
          %p497 = pneg %p473
        $region46: #{agent_forward.1} parent=31 // pred_check_branch
          %499 = sbr.rel (%p497) target = $region48
        $region47: #{agent_forward.1} parent=31 // pred_region
          %v500 = vld [vmem:[#allocation4] sm:$0x1]
          %v502 = vlaneseq
          %v503 = vshrl.u32 %v502, 7
          %v504 = vsub.s32 0, %v503
          %v505 = vrot.slane %v500, %v504
          %v507 = vmul.f32 %v344, %v505
          %v508 = vmul.f32 %v347, %v505
          %v509 = vmul.f32 %v352, %v505
          %v510 = vmul.f32 %v355, %v505
          %v511 = vmul.f32 %v360, %v505
          %v512 = vmul.f32 %v363, %v505
          %v513 = vmul.f32 %v368, %v505
          %v514 = vmul.f32 %v371, %v505
          %v515 = vmul.f32 %v376, %v505
          %v516 = vmul.f32 %v379, %v505
          %v517 = vmul.f32 %v384, %v505
          %v518 = vmul.f32 %v387, %v505
          %v519 = vmul.f32 %v392, %v505
          %v520 = vmul.f32 %v395, %v505
          %v521 = vmul.f32 %v400, %v505
          %v522 = vmul.f32 %v403, %v505
          %v523 = vld [vmem:[#allocation5] sm:$0x1]
          %v525 = vlaneseq
          %v526 = vshrl.u32 %v525, 7
          %v527 = vsub.s32 0, %v526
          %v528 = vrot.slane %v523, %v527
          %v530 = vadd.f32 %v507, %v528
          %v531 = vadd.f32 %v508, %v528
          %v532 = vadd.f32 %v509, %v528
          %v533 = vadd.f32 %v510, %v528
          %v534 = vadd.f32 %v511, %v528
          %v535 = vadd.f32 %v512, %v528
          %v536 = vadd.f32 %v513, %v528
          %v537 = vadd.f32 %v514, %v528
          %v538 = vadd.f32 %v515, %v528
          %v539 = vadd.f32 %v516, %v528
          %v540 = vadd.f32 %v517, %v528
          %v541 = vadd.f32 %v518, %v528
          %v542 = vadd.f32 %v519, %v528
          %v543 = vadd.f32 %v520, %v528
          %v544 = vadd.f32 %v521, %v528
          %v545 = vadd.f32 %v522, %v528
          %v546 = vpack.c.bf16 %v531, %v530
          %v547 = vpack.c.bf16 %v533, %v532
          %v548 = vpack.c.bf16 %v535, %v534
          %v549 = vpack.c.bf16 %v537, %v536
          %v550 = vpack.c.bf16 %v539, %v538
          %v551 = vpack.c.bf16 %v541, %v540
          %v552 = vpack.c.bf16 %v543, %v542
          %v553 = vpack.c.bf16 %v545, %v544
          %v562 = vunpack.c.l.b16 %v546
          %v563 = vunpack.c.h.b16 %v546
          %v564 = vunpack.c.l.b16 %v547
          %v565 = vunpack.c.h.b16 %v547
          %v566 = vunpack.c.l.b16 %v548
          %v567 = vunpack.c.h.b16 %v548
          %v568 = vunpack.c.l.b16 %v549
          %v569 = vunpack.c.h.b16 %v549
          %v570 = vunpack.c.l.b16 %v550
          %v571 = vunpack.c.h.b16 %v550
          %v572 = vunpack.c.l.b16 %v551
          %v573 = vunpack.c.h.b16 %v551
          %v574 = vunpack.c.l.b16 %v552
          %v575 = vunpack.c.h.b16 %v552
          %v576 = vunpack.c.l.b16 %v553
          %v577 = vunpack.c.h.b16 %v553
          %v578 = vpack.c.b16 %v562, %v562
          %v579 = vpack.c.b16 %v563, %v563
          %v580 = vpack.c.b16 %v564, %v564
          %v581 = vpack.c.b16 %v565, %v565
          %v582 = vpack.c.b16 %v566, %v566
          %v583 = vpack.c.b16 %v567, %v567
          %v584 = vpack.c.b16 %v568, %v568
          %v585 = vpack.c.b16 %v569, %v569
          %v586 = vpack.c.b16 %v570, %v570
          %v587 = vpack.c.b16 %v571, %v571
          %v588 = vpack.c.b16 %v572, %v572
          %v589 = vpack.c.b16 %v573, %v573
          %v590 = vpack.c.b16 %v574, %v574
          %v591 = vpack.c.b16 %v575, %v575
          %v592 = vpack.c.b16 %v576, %v576
          %v593 = vpack.c.b16 %v577, %v577
          %610 = vst [vmem:[%s178] sm:$0xf] %v578
          %611 = vst [vmem:[%s178 + $0x4] sm:$0xf] %v579
          %612 = vst [vmem:[%s178 + $0x8] sm:$0xf] %v580
          %613 = vst [vmem:[%s178 + $0xc] sm:$0xf] %v581
          %614 = vst [vmem:[%s178 + $0x10] sm:$0xf] %v582
          %615 = vst [vmem:[%s178 + $0x14] sm:$0xf] %v583
          %616 = vst [vmem:[%s178 + $0x18] sm:$0xf] %v584
          %617 = vst [vmem:[%s178 + $0x1c] sm:$0xf] %v585
          %618 = vst [vmem:[%s178 + $0x20] sm:$0xf] %v586
          %619 = vst [vmem:[%s178 + $0x24] sm:$0xf] %v587
          %620 = vst [vmem:[%s178 + $0x28] sm:$0xf] %v588
          %621 = vst [vmem:[%s178 + $0x2c] sm:$0xf] %v589
          %622 = vst [vmem:[%s178 + $0x30] sm:$0xf] %v590
          %623 = vst [vmem:[%s178 + $0x34] sm:$0xf] %v591
          %624 = vst [vmem:[%s178 + $0x38] sm:$0xf] %v592
          %625 = vst [vmem:[%s178 + $0x3c] sm:$0xf] %v593
        $region48: #{agent_forward.1} parent=31 // pred_fallthru
          _
        %s626 = sand.u32 %s107, 1
        %s627 = scalar_lea.sflag [#allocation7], %s626
        %s628 = sand.u32 %s107, 1
        %s629 = smul.addr %s628, 64
        %s630 = scalar_lea.vmem [#allocation6], %s629
        // Predicated region
        $region49: #{agent_forward.1} parent=31 // pred_check
          %p631 = pneg %p117
        $region50: #{agent_forward.1} parent=31 // pred_check_branch
          %633 = sbr.rel (%p631) target = $region52
        $region51: #{agent_forward.1} parent=31 // pred_region
          %s634 = smul.u32 %s22, %s21
          %s635 = smul.u32 16, %s634
          %s637 = ssub.s32 1024, 1024
          %638 = vsyncadd %s627, %s637
          %s639 = smul.addr %s635, 64
          %s640 = scalar_lea.hbm %s3, %s639
          %s641 = sshll.u32 %s630, 4
          %s642 = int_to_ptr.vmem [resolvable:$true] %s641
          %647 = dma.vmem_to_hbm [thread:$0]  %s642, 1024, %s640, %s627, 64, 64, 4
        $region52: #{agent_forward.1} parent=31 // pred_fallthru
          _
      $region32: #{agent_forward.1} parent=5 // pred_fallthru
        _
      %p648 = scmp.le.s32.totalorder 2, %s12
      // Predicated region
      $region53: #{agent_forward.1} parent=5 // pred_check
        %p649 = pneg %p648
      $region54: #{agent_forward.1} parent=5 // pred_check_branch
        %651 = sbr.rel (%p649) target = $region56
      $region55: #{agent_forward.1} parent=5 // pred_region
        %s652 = ssub.s32 %s12, 2
        // Predicated region
        $region57: #{agent_forward.1} parent=55 // pred_check
          %p653 = pneg %p123
        $region58: #{agent_forward.1} parent=55 // pred_check_branch
          %655 = sbr.rel (%p653) target = $region60
        $region59: #{agent_forward.1} parent=55 // pred_region
          %s656 = sand.u32 %s108, 1
          %s657 = scalar_lea.sflag [#allocation7], %s656
          %s658 = sand.u32 %s108, 1
          %s659 = smul.addr %s658, 64
          %s660 = scalar_lea.vmem [#allocation6], %s659
          %661 = dma.done %s657, 1024
        $region60: #{agent_forward.1} parent=55 // pred_fallthru
          _
      $region56: #{agent_forward.1} parent=5 // pred_fallthru
        _
    $region6: #{agent_forward.1} parent=1 // loop_footer
      %s16 = sadd.s32 1, %s12
    $region7: #{agent_forward.1} parent=1 // loop_footer_branch
      %11 = sbr.rel target = $region3
    $region8: #{agent_forward.1} parent=1 // loop_exit
      _
    %662 = vsyncpa [#allocation7], 1
    %s663 = scalar_lea.sflag [#allocation7], 1
    %664 = vsyncpa %s663, 1

</llo_original>
